<compile_context>
chip_gen: v5e
topology: v5e:2x2
jax: 0.10.0
libtpu: 0.0.40
codegen_flags: <defaults>
</compile_context>

<pallas_src>
import jax
import jax.numpy as jnp
import numpy as np
from jax.experimental import pallas as pl
from jax.experimental.pallas import tpu as pltpu


def _round_up(x, m):
    return ((x + m - 1) // m) * m


def value_head_kernel(x_ref, w_ref, b_ref, o_ref):
    # x_ref: (TB, D) VMEM; w_ref: (D, 1) VMEM; b_ref: (1, 1) SMEM; o_ref: (TB, 1) VMEM
    # MXU matmul (N=1) with f32 accumulation; no VPU upcast of x, no XLU lane reduce.
    v = jnp.dot(x_ref[...], w_ref[...], preferred_element_type=jnp.float32)
    o_ref[...] = (v + b_ref[0, 0]).astype(o_ref.dtype)


def value_network_forward(latent, weight, bias, *, block_rows=8192, min_block_rows=1024,
                          target_blocks=4, vmem_budget_bytes=24 * 1024 * 1024,
                          out_dtype=None):
    """latent: (B, D); weight: (1, D) (PyTorch nn.Linear layout); bias: (1,)."""
    B, D = latent.shape
    if out_dtype is None:
        # PyTorch (f32 params, f32 latent) returns f32; for bf16 latents the in-kernel
        # accumulation is still f32 — pass out_dtype=jnp.float32 to keep full precision.
        out_dtype = latent.dtype
    out_dtype = jnp.dtype(out_dtype)

    # ---- tile sizing (review items 4 & 5) ----------------------------------------
    in_itemsize = jnp.dtype(latent.dtype).itemsize
    # VMEM bytes per batch row: input row + the 128x lane-padded (TB, 1) output row.
    bytes_per_row = D * in_itemsize + 128 * out_dtype.itemsize
    tb_vmem_cap = max(8, ((vmem_budget_bytes // 2) // bytes_per_row) // 8 * 8)
    # Aim for ~target_blocks blocks on large batches (megacore split on v7x), but keep
    # blocks >= min_block_rows so the ~0.35us/step pipeline overhead stays small.
    tb_split = max(min_block_rows, _round_up(pl.cdiv(B, target_blocks), 8))
    TB = min(max(8, (block_rows // 8) * 8), tb_vmem_cap, tb_split, _round_up(B, 8))
    if TB >= B:
        TB = B  # one block covers the whole batch exactly (any B allowed)
    grid_b = pl.cdiv(B, TB)  # partial last block handled by Pallas (no wrapper pad copy)

    # ---- parameter plumbing (done once, tiny) --------------------------------------
    w = weight.reshape(D, 1).astype(latent.dtype)  # (1,D)->(D,1) column; MXU-native dtype
    b = bias.reshape(1, 1).astype(jnp.float32)     # scalar bias lives in SMEM

    out = pl.pallas_call(
        value_head_kernel,
        out_shape=jax.ShapeDtypeStruct((B, 1), out_dtype),
        grid=(grid_b,),
        in_specs=[
            pl.BlockSpec((TB, D), lambda i: (i, 0)),
            pl.BlockSpec((D, 1), lambda i: (0, 0)),          # fetched once (invariant block)
            pl.BlockSpec(memory_space=pltpu.MemorySpace.SMEM),  # scalar bias in SMEM
        ],
        out_specs=pl.BlockSpec((TB, 1), lambda i: (i, 0)),
        compiler_params=pltpu.CompilerParams(
            # Rows are independent -> shard the batch axis across both TCs on v7x.
            dimension_semantics=("parallel",),
            vmem_limit_bytes=32 * 1024 * 1024,
        ),
    )(latent, w, b)
    return out


def init_value_network_params(key, latent_dimension=256):
    """Deterministic init matching nn.Linear(latent_dim, 1):
    orthogonal_(weight, gain=1) -> unit-norm row for a (1, D) matrix; zeros_(bias)."""
    w = jax.random.normal(key, (1, latent_dimension), dtype=jnp.float32)
    w = w / jnp.linalg.norm(w)
    b = jnp.zeros((1,), dtype=jnp.float32)
    return w, b


if __name__ == "__main__":
    key = jax.random.PRNGKey(0)
    k_w, k_x = jax.random.split(key)

    latent_dimension = 256
    batch = 8

    weight, bias = init_value_network_params(k_w, latent_dimension)
    latent = jax.random.normal(k_x, (batch, latent_dimension), dtype=jnp.float32)

    value = value_network_forward(latent, weight, bias)
    value = jax.block_until_ready(value)

    # Reference in numpy (same math as torch: latent @ W.T + b).
    ref = np.asarray(latent) @ np.asarray(weight).T + np.asarray(bias)
    np.testing.assert_allclose(np.asarray(value), ref, rtol=1e-4, atol=1e-4)
    assert value.shape == (batch, 1)

    print("KERNEL_OK")
</pallas_src>

<mosaic_0001>
module attributes {stable_mosaic.version = 11 : i64} {
  func.func @value_head_kernel(%arg0: i32, %arg1: memref<8x256xf32, #tpu.memory_space<vmem>>, %arg2: memref<256x1xf32, #tpu.memory_space<vmem>>, %arg3: memref<1x1xf32, #tpu.memory_space<smem>>, %arg4: memref<8x1xf32, #tpu.memory_space<vmem>>) attributes {dimension_semantics = [#tpu.dimension_semantics<parallel>], iteration_bounds = array<i64: 1>, scalar_prefetch = 0 : i64, scratch_operands = 0 : i64, tpu.core_type = #tpu.core_type<tc>, window_params = [{transform_indices = @transform_0, window_bounds = array<i64: 8, 256>}, {pipeline_mode = #tpu.pipeline_mode<synchronous>, transform_indices = @transform_1, window_bounds = array<i64: 256, 1>}, {transform_indices = @transform_2, window_bounds = array<i64: 1, 1>}, {transform_indices = @transform_3, window_bounds = array<i64: 8, 1>}]} {
    %c0 = arith.constant 0 : index
    %c0_0 = arith.constant 0 : index
    %0 = vector.load %arg1[%c0, %c0_0] : memref<8x256xf32, #tpu.memory_space<vmem>>, vector<8x256xf32>
    %c0_1 = arith.constant 0 : index
    %c0_2 = arith.constant 0 : index
    %1 = vector.load %arg2[%c0_1, %c0_2] : memref<256x1xf32, #tpu.memory_space<vmem>>, vector<256x1xf32>
    %cst = arith.constant dense<0.000000e+00> : vector<8x1xf32>
    %2 = tpu.matmul %0, %1, %cst {dimension_numbers = #tpu.dot_dimension_numbers<[1], [0], [0], [1], [0, 0, 1, 1], [], []>} : vector<8x256xf32>, vector<256x1xf32>, vector<8x1xf32> -> vector<8x1xf32>
    %c0_3 = arith.constant 0 : index
    %c0_4 = arith.constant 0 : index
    %3 = memref.load %arg3[%c0_3, %c0_4] : memref<1x1xf32, #tpu.memory_space<smem>>
    %4 = vector.broadcast %3 : f32 to vector<8x1xf32>
    %5 = arith.addf %2, %4 : vector<8x1xf32>
    %c0_5 = arith.constant 0 : index
    %c0_6 = arith.constant 0 : index
    %6 = vector.load %arg4[%c0_5, %c0_6] : memref<8x1xf32, #tpu.memory_space<vmem>>, vector<8x1xf32>
    tpu.vector_store %arg4[%c0_5, %c0_6], %5 {strides = array<i32>} : memref<8x1xf32, #tpu.memory_space<vmem>>, vector<8x1xf32>,
    return
  }
  func.func @transform_0(%arg0: i32) -> (i32, i32) {
    %c0_i32 = arith.constant 0 : i32
    %c0_i32_0 = arith.constant 0 : i32
    return %arg0, %c0_i32 : i32, i32
  }
  func.func @transform_1(%arg0: i32) -> (i32, i32) {
    %c0_i32 = arith.constant 0 : i32
    %c0_i32_0 = arith.constant 0 : i32
    %c0_i32_1 = arith.constant 0 : i32
    return %c0_i32, %c0_i32_0 : i32, i32
  }
  func.func @transform_2(%arg0: i32) -> (i32, i32) {
    %c0_i32 = arith.constant 0 : i32
    %c0_i32_0 = arith.constant 0 : i32
    %c0_i32_1 = arith.constant 0 : i32
    return %c0_i32, %c0_i32_0 : i32, i32
  }
  func.func @transform_3(%arg0: i32) -> (i32, i32) {
    %c0_i32 = arith.constant 0 : i32
    %c0_i32_0 = arith.constant 0 : i32
    return %arg0, %c0_i32 : i32, i32
  }
}

</mosaic_0001>

<llo_original>
// kernel: tpu_custom_call.1
$region0: #{tpu_custom_call.1}
  #allocation0 [shape = 'u32[]', space=smem, size = 0x4, offset = 0x4, fixed_abs, tag = 'smem constant byte address 0x4 - core index']
  #allocation1 [shape = 'u32[72,128]{1,0:T(1,128)}', space=vmem, size = 0x9000, scoped, tag = 'internal scratch']
  #allocation2 [shape = 'f32[1,1]{1,0:T(1,128)S(6)}', space=smem, size = 0x200, scoped, tag = 'scoped memory for tpu_custom_call.1']
  %s0 = inlined_call_operand.vmem [shape: f32[8,256], index: 0, kind: input, shape index: {}]
  %s1 = inlined_call_operand.vmem [shape: f32[256,1], index: 1, kind: input, shape index: {}]
  %s2 = inlined_call_operand.<no memory space> [shape: f32[1,1], index: 2, kind: input, shape index: {}]
  %s3 = inlined_call_operand.vmem [shape: f32[8,1], index: 3, kind: output, shape index: {}]
  %s4 = sld [smem:[#allocation0]]
  $region22: #{tpu_custom_call.1} parent=0
    _
  %s6 = ssub.s32 1, %s4
  %s7 = scalar_select 0, %s6, %s4
  %8 = sst [smem:[#allocation2]] %s2
  // Predicated region
  $region2: #{tpu_custom_call.1} parent=0 // pred_check
    _
  $region3: #{tpu_custom_call.1} parent=0 // pred_check_branch
    %10 = sbr.rel (0) target = $region5
  $region4: #{tpu_custom_call.1} parent=0 // pred_region
    _
  $region5: #{tpu_custom_call.1} parent=0 // pred_fallthru
    _
  // Predicated region
  $region6: #{tpu_custom_call.1} parent=0 // pred_check
    _
  $region7: #{tpu_custom_call.1} parent=0 // pred_check_branch
    %12 = sbr.rel (0) target = $region9
  $region8: #{tpu_custom_call.1} parent=0 // pred_region
    _
  $region9: #{tpu_custom_call.1} parent=0 // pred_fallthru
    _
  // Predicated region
  $region10: #{tpu_custom_call.1} parent=0 // pred_check
    _
  $region11: #{tpu_custom_call.1} parent=0 // pred_check_branch
    %14 = sbr.rel (0) target = $region13
  $region12: #{tpu_custom_call.1} parent=0 // pred_region
    _
  $region13: #{tpu_custom_call.1} parent=0 // pred_fallthru
    _
  %v15 = vld [vmem:[%s0] sm:$0xff]
  %v16 = vld [vmem:[%s0 + $0x8] sm:$0xff]
  %v17 = vld [vmem:[%s1] sm:$0xff]
  %v18 = vld [vmem:[%s1 + $0x8] sm:$0xff]
  %v19 = vld [vmem:[%s1 + $0x10] sm:$0xff]
  %v20 = vld [vmem:[%s1 + $0x18] sm:$0xff]
  %v21 = vld [vmem:[%s1 + $0x20] sm:$0xff]
  %v22 = vld [vmem:[%s1 + $0x28] sm:$0xff]
  %v23 = vld [vmem:[%s1 + $0x30] sm:$0xff]
  %v24 = vld [vmem:[%s1 + $0x38] sm:$0xff]
  %v25 = vld [vmem:[%s1 + $0x40] sm:$0xff]
  %v26 = vld [vmem:[%s1 + $0x48] sm:$0xff]
  %v27 = vld [vmem:[%s1 + $0x50] sm:$0xff]
  %v28 = vld [vmem:[%s1 + $0x58] sm:$0xff]
  %v29 = vld [vmem:[%s1 + $0x60] sm:$0xff]
  %v30 = vld [vmem:[%s1 + $0x68] sm:$0xff]
  %v31 = vld [vmem:[%s1 + $0x70] sm:$0xff]
  %v32 = vld [vmem:[%s1 + $0x78] sm:$0xff]
  %v33 = vld [vmem:[%s1 + $0x80] sm:$0xff]
  %v34 = vld [vmem:[%s1 + $0x88] sm:$0xff]
  %v35 = vld [vmem:[%s1 + $0x90] sm:$0xff]
  %v36 = vld [vmem:[%s1 + $0x98] sm:$0xff]
  %v37 = vld [vmem:[%s1 + $0xa0] sm:$0xff]
  %v38 = vld [vmem:[%s1 + $0xa8] sm:$0xff]
  %v39 = vld [vmem:[%s1 + $0xb0] sm:$0xff]
  %v40 = vld [vmem:[%s1 + $0xb8] sm:$0xff]
  %v41 = vld [vmem:[%s1 + $0xc0] sm:$0xff]
  %v42 = vld [vmem:[%s1 + $0xc8] sm:$0xff]
  %v43 = vld [vmem:[%s1 + $0xd0] sm:$0xff]
  %v44 = vld [vmem:[%s1 + $0xd8] sm:$0xff]
  %v45 = vld [vmem:[%s1 + $0xe0] sm:$0xff]
  %v46 = vld [vmem:[%s1 + $0xe8] sm:$0xff]
  %v47 = vld [vmem:[%s1 + $0xf0] sm:$0xff]
  %v48 = vld [vmem:[%s1 + $0xf8] sm:$0xff]
  %s49 = sld [smem:[#allocation2]]
  %v50 = vstv %s49
  %51 = vmatpush.msra.mxu0 %v32
  %52 = vmatpush.msra.mxu0 %v31
  %53 = vmatpush.msra.mxu0 %v30
  %54 = vmatpush.msra.mxu0 %v29
  %55 = vmatpush.msra.mxu0 %v28
  %56 = vmatpush.msra.mxu0 %v27
  %57 = vmatpush.msra.mxu0 %v26
  %58 = vmatpush.msra.mxu0 %v25
  %59 = vmatpush.msra.mxu0 %v24
  %60 = vmatpush.msra.mxu0 %v23
  %61 = vmatpush.msra.mxu0 %v22
  %62 = vmatpush.msra.mxu0 %v21
  %63 = vmatpush.msra.mxu0 %v20
  %64 = vmatpush.msra.mxu0 %v19
  %65 = vmatpush.msra.mxu0 %v18
  %66 = vmatpush.msra.mxu0 %v17
  %67 = vmatmul.f32.gmra.mxu0 %v15
  %v68 = vpop.f32.mrf.mxu0
  %v69 = vadd.f32 %v50, %v68
  %70 = vdwg.mxu0
  %71 = vmatpush.msra.mxu0 %v48
  %72 = vmatpush.msra.mxu0 %v47
  %73 = vmatpush.msra.mxu0 %v46
  %74 = vmatpush.msra.mxu0 %v45
  %75 = vmatpush.msra.mxu0 %v44
  %76 = vmatpush.msra.mxu0 %v43
  %77 = vmatpush.msra.mxu0 %v42
  %78 = vmatpush.msra.mxu0 %v41
  %79 = vmatpush.msra.mxu0 %v40
  %80 = vmatpush.msra.mxu0 %v39
  %81 = vmatpush.msra.mxu0 %v38
  %82 = vmatpush.msra.mxu0 %v37
  %83 = vmatpush.msra.mxu0 %v36
  %84 = vmatpush.msra.mxu0 %v35
  %85 = vmatpush.msra.mxu0 %v34
  %86 = vmatpush.msra.mxu0 %v33
  %87 = vmatmul.f32.gmra.mxu0 %v16
  %v88 = vpop.f32.mrf.mxu0
  %v89 = vadd.f32 %v69, %v88
  %90 = vdwg.mxu0
  %vm91 = vcmask 7168
  %92 = vst.msk [vmem:[%s3] sm:$0xff] %vm91, %v89
  // Predicated region
  $region14: #{tpu_custom_call.1} parent=0 // pred_check
    _
  $region15: #{tpu_custom_call.1} parent=0 // pred_check_branch
    %94 = sbr.rel (0) target = $region17
  $region16: #{tpu_custom_call.1} parent=0 // pred_region
    _
  $region17: #{tpu_custom_call.1} parent=0 // pred_fallthru
    _
  // Predicated region
  $region18: #{tpu_custom_call.1} parent=0 // pred_check
    _
  $region19: #{tpu_custom_call.1} parent=0 // pred_check_branch
    %96 = sbr.rel (0) target = $region21
  $region20: #{tpu_custom_call.1} parent=0 // pred_region
    _
  $region21: #{tpu_custom_call.1} parent=0 // pred_fallthru
    _

</llo_original>
